<compile_context>
chip_gen: v7x
topology: tpu7x:2x2x1
jax: 0.10.0
libtpu: 0.0.40
codegen_flags: <defaults>
</compile_context>

<pallas_src>
import jax
import jax.numpy as jnp
from jax.experimental import pallas as pl
from jax.experimental.pallas import tpu as pltpu


# ----------------------------- helpers --------------------------------------

def _round_up(x, m):
    return (x + m - 1) // m * m


def _sublane(dtype):
    # f32 -> 8, bf16 -> 16, int8/fp8 -> 32
    return max(8, 32 // jnp.dtype(dtype).itemsize)


def _pad2d(a, rows, cols):
    pr, pc = rows - a.shape[0], cols - a.shape[1]
    if pr == 0 and pc == 0:
        return a
    return jnp.pad(a, ((0, pr), (0, pc)))


_VMEM_BUDGET = 40 * 1024 * 1024  # double-buffered working-set cap (v7x-safe)


def _footprint_bytes(tm, tn, tk, n_k_steps, compute_dtype, out_dtype):
    c = jnp.dtype(compute_dtype).itemsize
    o = jnp.dtype(out_dtype).itemsize
    buf = 2 * (tm * tk * c + tk * tn * c + tn * 4) + 2 * tm * tn * o
    if n_k_steps > 1:
        buf += tm * tn * 4  # f32 accumulator scratch
    return buf


def _default_tiles(B, in_f, out_f, compute_dtype, out_dtype):
    sub = _sublane(compute_dtype)
    M_pad = _round_up(B, sub)
    K_pad = _round_up(in_f, 128)
    N_pad = _round_up(out_f, 128)

    tm = min(256, M_pad)
    tn = min(512, N_pad)
    # v7x megacore: keep >= 2 parallel grid points when B fits one M tile.
    if M_pad <= tm and N_pad >= 256:
        tn = min(tn, max(128, (N_pad // 2) // 128 * 128))
    tk = min(K_pad, 4096)  # prefer collapsing K entirely

    def fits(tm_, tn_, tk_):
        nks = 1 if tk_ >= K_pad else 2
        return _footprint_bytes(tm_, tn_, tk_, nks,
                                compute_dtype, out_dtype) <= _VMEM_BUDGET

    while not fits(tm, tn, tk) and tk > 512:
        tk = max(512, _round_up(tk // 2, 128))
    while not fits(tm, tn, tk) and tn > 128:
        tn = max(128, _round_up(tn // 2, 128))
    while not fits(tm, tn, tk) and tm > sub:
        tm = max(sub, _round_up(tm // 2, sub))
    return tm, tn, tk


# ----------------------------- kernels ---------------------------------------

def _encoder_kernel_single_k(x_ref, w_ref, b_ref, o_ref):
    # x: (tm, K)  w: (K, tn)  b: (1, tn)  o: (tm, tn)
    y = jnp.dot(x_ref[...], w_ref[...], preferred_element_type=jnp.float32)
    y = y + b_ref[...].astype(jnp.float32)
    o_ref[...] = jnp.maximum(y, 0.0).astype(o_ref.dtype)


def _encoder_kernel_multi_k(x_ref, w_ref, b_ref, o_ref, acc_ref):
    # x: (tm, tk)  w: (tk, tn)  b: (1, tn)  o: (tm, tn)  acc: (tm, tn) f32
    k = pl.program_id(2)

    @pl.when(k == 0)
    def _init():
        acc_ref[...] = jnp.zeros_like(acc_ref)

    acc_ref[...] += jnp.dot(x_ref[...], w_ref[...],
                            preferred_element_type=jnp.float32)

    @pl.when(k == pl.num_programs(2) - 1)
    def _finalize():
        y = acc_ref[...] + b_ref[...].astype(jnp.float32)
        o_ref[...] = jnp.maximum(y, 0.0).astype(o_ref.dtype)


# ----------------------------- wrappers --------------------------------------

def prepare_encoder_params(weight, bias, *, compute_dtype=jnp.bfloat16,
                           tn=128, tk=128):
    """One-time prep of nn.Linear params: (out_f, in_f) -> padded (K, N) bf16.

    Hoist this out of the per-call path for repeated applications of the layer.
    Bias stays f32 (applied in the f32 epilogue).
    """
    out_f, in_f = weight.shape
    K = _round_up(in_f, tk)
    N = _round_up(out_f, tn)
    w_kn = _pad2d(weight.T.astype(compute_dtype), K, N)     # (in_f, out_f) major
    b_row = _pad2d(bias.reshape(1, out_f).astype(jnp.float32), 1, N)
    return w_kn, b_row


def encoder_block_apply(x, w_kn, b_row, out_f, *, tm, tn, tk,
                        compute_dtype=jnp.bfloat16):
    """relu(x @ W + b) with W already in padded (K, N) layout."""
    B, in_f = x.shape
    K, N = w_kn.shape
    assert K >= in_f and K % tk == 0 and N % tn == 0
    assert tn % 128 == 0 and tk % 128 == 0
    assert tm % _sublane(compute_dtype) == 0

    out_dtype = x.dtype
    M = _round_up(B, tm)
    xp = _pad2d(x.astype(compute_dtype), M, K)      # zero pad rows/cols are inert

    n_m, n_n, n_k = M // tm, N // tn, K // tk
    footprint = _footprint_bytes(tm, tn, tk, n_k, compute_dtype, out_dtype)
    vmem_limit = int(max(32 * 1024 * 1024, footprint + 4 * 1024 * 1024))

    if n_k == 1:
        # K collapsed: single dot + bias + ReLU per block, no scratch.
        grid = (n_m, n_n)
        kernel = _encoder_kernel_single_k
        in_specs = [
            pl.BlockSpec((tm, tk), lambda i, j: (i, 0)),    # activations
            pl.BlockSpec((tk, tn), lambda i, j: (0, j)),    # weight (K, N)
            pl.BlockSpec((1, tn), lambda i, j: (0, j)),     # bias per-N tile
        ]
        out_specs = pl.BlockSpec((tm, tn), lambda i, j: (i, j))
        scratch = []
        dims = ("parallel", "parallel")
    else:
        # K-innermost reduction with f32 VMEM accumulator.
        grid = (n_m, n_n, n_k)
        kernel = _encoder_kernel_multi_k
        in_specs = [
            pl.BlockSpec((tm, tk), lambda i, j, k: (i, k)),
            pl.BlockSpec((tk, tn), lambda i, j, k: (k, j)),
            pl.BlockSpec((1, tn), lambda i, j, k: (0, j)),
        ]
        out_specs = pl.BlockSpec((tm, tn), lambda i, j, k: (i, j))
        scratch = [pltpu.VMEM((tm, tn), jnp.float32)]
        dims = ("parallel", "parallel", "arbitrary")

    out = pl.pallas_call(
        kernel,
        out_shape=jax.ShapeDtypeStruct((M, N), out_dtype),
        grid_spec=pltpu.PrefetchScalarGridSpec(
            num_scalar_prefetch=0,
            grid=grid,
            in_specs=in_specs,
            out_specs=out_specs,
            scratch_shapes=scratch,
        ),
        compiler_params=pltpu.CompilerParams(
            dimension_semantics=dims,
            vmem_limit_bytes=vmem_limit,
        ),
    )(xp, w_kn, b_row)

    if (M, N) != (B, out_f):
        out = out[:B, :out_f]
    return out


def encoder_block(x, weight, bias, *, compute_dtype=jnp.bfloat16,
                  tm=None, tn=None, tk=None):
    """relu(x @ weight.T + bias).

    x: (B, in_f); weight: (out_f, in_f) (PyTorch nn.Linear layout);
    bias: (out_f,). MXU runs in `compute_dtype` with f32 accumulation and an
    f32 bias/ReLU epilogue; output keeps x.dtype.
    """
    B, in_f = x.shape
    out_f, in_f_w = weight.shape
    assert in_f == in_f_w, "weight / input feature mismatch"

    dtm, dtn, dtk = _default_tiles(B, in_f, out_f, compute_dtype, x.dtype)
    tm = tm if tm is not None else dtm
    tn = tn if tn is not None else dtn
    tk = tk if tk is not None else dtk

    w_kn, b_row = prepare_encoder_params(
        weight, bias, compute_dtype=compute_dtype, tn=tn, tk=tk)
    return encoder_block_apply(x, w_kn, b_row, out_f,
                               tm=tm, tn=tn, tk=tk, compute_dtype=compute_dtype)


def reference(x, weight, bias):
    return jnp.maximum(x @ weight.T + bias, 0.0)


# ----------------------------- tests -----------------------------------------

if __name__ == "__main__":
    key = jax.random.PRNGKey(0)
    ks = jax.random.split(key, 9)

    def linear_init(kw, kb, out_f, in_f):
        bound = 1.0 / (in_f ** 0.5)
        w = jax.random.uniform(kw, (out_f, in_f), minval=-bound, maxval=bound,
                               dtype=jnp.float32)
        b = jax.random.uniform(kb, (out_f,), minval=-bound, maxval=bound,
                               dtype=jnp.float32)
        return w, b

    # Case 1: nominal module shapes (bf16 MXU compute, f32 accumulation).
    B1, IN1, OUT1 = 8, 32, 64
    x1 = jax.random.normal(ks[0], (B1, IN1), dtype=jnp.float32)
    w1, b1 = linear_init(ks[1], ks[2], OUT1, IN1)
    out1 = jax.block_until_ready(encoder_block(x1, w1, b1))
    ref1 = reference(x1, w1, b1)
    assert out1.shape == (B1, OUT1)
    assert jnp.allclose(out1, ref1, atol=3e-2, rtol=3e-2), "case 1 (bf16) mismatch"

    # Case 1b: exact f32 compute path (bit-level semantics of the module).
    out1f = jax.block_until_ready(
        encoder_block(x1, w1, b1, compute_dtype=jnp.float32))
    assert jnp.allclose(out1f, ref1, atol=1e-5, rtol=1e-5), "case 1b (f32) mismatch"

    # Case 2: collapsed-K single-pass kernel, 2 parallel N tiles,
    #         params prepared once (hoisted out of the per-call path).
    B2, IN2, OUT2 = 256, 384, 256
    x2 = jax.random.normal(ks[3], (B2, IN2), dtype=jnp.float32)
    w2, b2 = linear_init(ks[4], ks[5], OUT2, IN2)
    tm2, tn2, tk2 = _default_tiles(B2, IN2, OUT2, jnp.bfloat16, x2.dtype)
    w2_kn, b2_row = prepare_encoder_params(w2, b2, compute_dtype=jnp.bfloat16,
                                           tn=tn2, tk=tk2)
    out2 = jax.block_until_ready(
        encoder_block_apply(x2, w2_kn, b2_row, OUT2,
                            tm=tm2, tn=tn2, tk=tk2,
                            compute_dtype=jnp.bfloat16))
    ref2 = reference(x2, w2, b2)
    assert out2.shape == (B2, OUT2)
    assert jnp.allclose(out2, ref2, atol=3e-2, rtol=3e-2), "case 2 mismatch"

    # Case 3: forced K-split (exercises the f32-accumulator multi-K kernel).
    B3, IN3, OUT3 = 64, 512, 256
    x3 = jax.random.normal(ks[6], (B3, IN3), dtype=jnp.float32)
    w3, b3 = linear_init(ks[7], ks[8], OUT3, IN3)
    out3 = jax.block_until_ready(encoder_block(x3, w3, b3, tk=256))
    ref3 = reference(x3, w3, b3)
    assert out3.shape == (B3, OUT3)
    assert jnp.allclose(out3, ref3, atol=3e-2, rtol=3e-2), "case 3 mismatch"

    print("KERNEL_OK")
</pallas_src>

<mosaic_0001>
module attributes {stable_mosaic.version = 11 : i64} {
  func.func @_encoder_kernel_single_k(%arg0: i32, %arg1: i32, %arg2: memref<16x128xbf16, #tpu.memory_space<vmem>>, %arg3: memref<128x128xbf16, #tpu.memory_space<vmem>>, %arg4: memref<1x128xf32, #tpu.memory_space<vmem>>, %arg5: memref<16x128xf32, #tpu.memory_space<vmem>>) attributes {dimension_semantics = [#tpu.dimension_semantics<parallel>, #tpu.dimension_semantics<parallel>], iteration_bounds = array<i64: 1, 1>, scalar_prefetch = 0 : i64, scratch_operands = 0 : i64, tpu.core_type = #tpu.core_type<tc>, window_params = [{transform_indices = @transform_0, window_bounds = array<i64: 16, 128>}, {transform_indices = @transform_1, window_bounds = array<i64: 128, 128>}, {transform_indices = @transform_2, window_bounds = array<i64: 1, 128>}, {transform_indices = @transform_3, window_bounds = array<i64: 16, 128>}]} {
    %c0 = arith.constant 0 : index
    %c0_0 = arith.constant 0 : index
    %0 = vector.load %arg2[%c0, %c0_0] : memref<16x128xbf16, #tpu.memory_space<vmem>>, vector<16x128xbf16>
    %c0_1 = arith.constant 0 : index
    %c0_2 = arith.constant 0 : index
    %1 = vector.load %arg3[%c0_1, %c0_2] : memref<128x128xbf16, #tpu.memory_space<vmem>>, vector<128x128xbf16>
    %cst = arith.constant dense<0.000000e+00> : vector<16x128xf32>
    %2 = tpu.matmul %0, %1, %cst {dimension_numbers = #tpu.dot_dimension_numbers<[1], [0], [0], [1], [0, 0, 1, 1], [], []>} : vector<16x128xbf16>, vector<128x128xbf16>, vector<16x128xf32> -> vector<16x128xf32>
    %c0_3 = arith.constant 0 : index
    %c0_4 = arith.constant 0 : index
    %3 = vector.load %arg4[%c0_3, %c0_4] : memref<1x128xf32, #tpu.memory_space<vmem>>, vector<1x128xf32>
    %4 = vector.broadcast %3 : vector<1x128xf32> to vector<16x128xf32>
    %5 = arith.addf %2, %4 : vector<16x128xf32>
    %cst_5 = arith.constant 0.000000e+00 : f32
    %6 = vector.broadcast %cst_5 : f32 to vector<16x128xf32>
    %7 = arith.maximumf %5, %6 : vector<16x128xf32>
    %c0_6 = arith.constant 0 : index
    %c0_7 = arith.constant 0 : index
    %8 = vector.load %arg5[%c0_6, %c0_7] : memref<16x128xf32, #tpu.memory_space<vmem>>, vector<16x128xf32>
    tpu.vector_store %arg5[%c0_6, %c0_7], %7 {strides = array<i32>} : memref<16x128xf32, #tpu.memory_space<vmem>>, vector<16x128xf32>,
    return
  }
  func.func @transform_0(%arg0: i32, %arg1: i32) -> (i32, i32) {
    %c0_i32 = arith.constant 0 : i32
    %c0_i32_0 = arith.constant 0 : i32
    return %arg0, %c0_i32 : i32, i32
  }
  func.func @transform_1(%arg0: i32, %arg1: i32) -> (i32, i32) {
    %c0_i32 = arith.constant 0 : i32
    %c0_i32_0 = arith.constant 0 : i32
    return %c0_i32, %arg1 : i32, i32
  }
  func.func @transform_2(%arg0: i32, %arg1: i32) -> (i32, i32) {
    %c0_i32 = arith.constant 0 : i32
    %c0_i32_0 = arith.constant 0 : i32
    return %c0_i32, %arg1 : i32, i32
  }
  func.func @transform_3(%arg0: i32, %arg1: i32) -> (i32, i32) {
    %c0_i32 = arith.constant 0 : i32
    return %arg0, %arg1 : i32, i32
  }
}

</mosaic_0001>

<llo_original>
// kernel: tpu_custom_call.1
$region0: #{tpu_custom_call.1}
  #allocation0 [shape = 'u32[]', space=smem, size = 0x4, offset = 0x4, fixed_abs, tag = 'smem constant byte address 0x4 - core index']
  #allocation1 [shape = 'u32[144,128]{1,0:T(1,128)}', space=vmem, size = 0x12000, scoped, tag = 'internal scratch']
  %s0 = inlined_call_operand.hbm [shape: bf16[16,128], index: 0, kind: input, shape index: {}]
  %s1 = inlined_call_operand.hbm [shape: bf16[128,128], index: 1, kind: input, shape index: {}]
  %s2 = inlined_call_operand.vmem [shape: f32[1,128], index: 2, kind: input, shape index: {}]
  %s3 = inlined_call_operand.hbm [shape: f32[16,128], index: 3, kind: output, shape index: {}]
  %s4 = sld [smem:[#allocation0]]
  $region30: #{tpu_custom_call.1} parent=0
    _
  %s6 = ssub.s32 1, %s4
  %s7 = scalar_select 0, %s6, %s4
  $region1: #{tpu_custom_call.1} parent=0
    #allocation2 [shape = 'u8[4096]{0}', space=vmem, size = 0x1000, scoped, tag = 'input window, operand 0, single buffered']
    #allocation3 [shape = 's32[1]{0}', space=sflag, size = 0x4, scoped, tag = 'scoped memory for tpu_custom_call.1']
    #allocation4 [shape = 's32[1]{0}', space=sflag, size = 0x4, scoped, tag = 'scoped memory for tpu_custom_call.1']
    #allocation5 [shape = 'u8[32768]{0}', space=vmem, size = 0x8000, scoped, tag = 'input window, operand 1, single buffered']
    #allocation6 [shape = 's32[1]{0}', space=sflag, size = 0x4, scoped, tag = 'scoped memory for tpu_custom_call.1']
    #allocation7 [shape = 'u8[8192]{0}', space=vmem, size = 0x2000, scoped, tag = 'output window, operand 0, single buffered']
    %8 = vsyncpa [#allocation3], 0
    %9 = vsyncpa [#allocation6], 0
    %10 = vsyncpa [#allocation4], 0
    // Predicated region
    $region2: #{tpu_custom_call.1} parent=1 // pred_check
      _
    $region3: #{tpu_custom_call.1} parent=1 // pred_check_branch
      %12 = sbr.rel (0) target = $region5
    $region4: #{tpu_custom_call.1} parent=1 // pred_region
      %s14 = ssub.s32 128, 128
      %15 = vsyncadd [#allocation3], %s14
      %s16 = sshll.u32 [#allocation2], 4
      %s17 = int_to_ptr.vmem [resolvable:$true] %s16
      %22 = dma.hbm_to_vmem [thread:$0]  %s0, 128, %s17, [#allocation3], 64, 64, 4
    $region5: #{tpu_custom_call.1} parent=1 // pred_fallthru
      _
    // Predicated region
    $region6: #{tpu_custom_call.1} parent=1 // pred_check
      _
    $region7: #{tpu_custom_call.1} parent=1 // pred_check_branch
      %24 = sbr.rel (0) target = $region9
    $region8: #{tpu_custom_call.1} parent=1 // pred_region
      %s26 = ssub.s32 1024, 1024
      %27 = vsyncadd [#allocation6], %s26
      %s28 = sshll.u32 [#allocation5], 4
      %s29 = int_to_ptr.vmem [resolvable:$true] %s28
      %34 = dma.hbm_to_vmem [thread:$0]  %s1, 1024, %s29, [#allocation6], 64, 64, 4
    $region9: #{tpu_custom_call.1} parent=1 // pred_fallthru
      _
    // Predicated region
    $region10: #{tpu_custom_call.1} parent=1 // pred_check
      _
    $region11: #{tpu_custom_call.1} parent=1 // pred_check_branch
      %36 = sbr.rel (0) target = $region13
    $region12: #{tpu_custom_call.1} parent=1 // pred_region
      _
    $region13: #{tpu_custom_call.1} parent=1 // pred_fallthru
      _
    // Predicated region
    $region14: #{tpu_custom_call.1} parent=1 // pred_check
      _
    $region15: #{tpu_custom_call.1} parent=1 // pred_check_branch
      %38 = sbr.rel (0) target = $region17
    $region16: #{tpu_custom_call.1} parent=1 // pred_region
      %39 = dma.done [#allocation3], 128
    $region17: #{tpu_custom_call.1} parent=1 // pred_fallthru
      _
    // Predicated region
    $region18: #{tpu_custom_call.1} parent=1 // pred_check
      _
    $region19: #{tpu_custom_call.1} parent=1 // pred_check_branch
      %41 = sbr.rel (0) target = $region21
    $region20: #{tpu_custom_call.1} parent=1 // pred_region
      %42 = dma.done [#allocation6], 1024
    $region21: #{tpu_custom_call.1} parent=1 // pred_fallthru
      _
    %v44 = vld [vmem:[#allocation2] sm:$0xf]
    %v45 = vld [vmem:[#allocation2 + $0x4] sm:$0xf]
    %v46 = vld [vmem:[#allocation5] sm:$0xf]
    %v47 = vld [vmem:[#allocation5 + $0x4] sm:$0xf]
    %v48 = vld [vmem:[#allocation5 + $0x8] sm:$0xf]
    %v49 = vld [vmem:[#allocation5 + $0xc] sm:$0xf]
    %v50 = vld [vmem:[#allocation5 + $0x10] sm:$0xf]
    %v51 = vld [vmem:[#allocation5 + $0x14] sm:$0xf]
    %v52 = vld [vmem:[#allocation5 + $0x18] sm:$0xf]
    %v53 = vld [vmem:[#allocation5 + $0x1c] sm:$0xf]
    %v54 = vld [vmem:[#allocation5 + $0x20] sm:$0xf]
    %v55 = vld [vmem:[#allocation5 + $0x24] sm:$0xf]
    %v56 = vld [vmem:[#allocation5 + $0x28] sm:$0xf]
    %v57 = vld [vmem:[#allocation5 + $0x2c] sm:$0xf]
    %v58 = vld [vmem:[#allocation5 + $0x30] sm:$0xf]
    %v59 = vld [vmem:[#allocation5 + $0x34] sm:$0xf]
    %v60 = vld [vmem:[#allocation5 + $0x38] sm:$0xf]
    %v61 = vld [vmem:[#allocation5 + $0x3c] sm:$0xf]
    %v62 = vld [vmem:[%s2] sm:$0x1]
    %v64 = vlaneseq
    %v65 = vshrl.u32 %v64, 7
    %v66 = vsub.s32 0, %v65
    %v67 = vrot.slane %v62, %v66
    %v71 = vunpack.c.l.b16 %v44
    %v72 = vunpack.c.l.b16 %v45
    %v73 = vpack.c.b16 %v72, %v71
    %v91 = vunpack.c.l.b16 %v46
    %v92 = vunpack.c.l.b16 %v47
    %v93 = vunpack.c.l.b16 %v48
    %v94 = vunpack.c.l.b16 %v49
    %v95 = vunpack.c.l.b16 %v50
    %v96 = vunpack.c.l.b16 %v51
    %v97 = vunpack.c.l.b16 %v52
    %v98 = vunpack.c.l.b16 %v53
    %v99 = vunpack.c.l.b16 %v54
    %v100 = vunpack.c.l.b16 %v55
    %v101 = vunpack.c.l.b16 %v56
    %v102 = vunpack.c.l.b16 %v57
    %v103 = vunpack.c.l.b16 %v58
    %v104 = vunpack.c.l.b16 %v59
    %v105 = vunpack.c.l.b16 %v60
    %v106 = vunpack.c.l.b16 %v61
    %v107 = vpack.c.b16 %v92, %v91
    %v108 = vpack.c.b16 %v94, %v93
    %v109 = vpack.c.b16 %v96, %v95
    %v110 = vpack.c.b16 %v98, %v97
    %v111 = vpack.c.b16 %v100, %v99
    %v112 = vpack.c.b16 %v102, %v101
    %v113 = vpack.c.b16 %v104, %v103
    %v114 = vpack.c.b16 %v106, %v105
    %123 = vmatprep.subr.bf16.mxu0 0
    %124 = vmatpush1.bf16.msra.mxu0 %v107
    %125 = vmatprep.subr.bf16.mxu0 0
    %126 = vmatpush1.bf16.msra.mxu0 %v108
    %127 = vmatprep.subr.bf16.mxu0 0
    %128 = vmatpush1.bf16.msra.mxu0 %v109
    %129 = vmatprep.subr.bf16.mxu0 0
    %130 = vmatpush1.bf16.msra.mxu0 %v110
    %131 = vmatprep.subr.bf16.mxu0 0
    %132 = vmatpush1.bf16.msra.mxu0 %v111
    %133 = vmatprep.subr.bf16.mxu0 0
    %134 = vmatpush1.bf16.msra.mxu0 %v112
    %135 = vmatprep.subr.bf16.mxu0 0
    %136 = vmatpush1.bf16.msra.mxu0 %v113
    %137 = vmatprep.subr.bf16.mxu0 0
    %138 = vmatpush1.bf16.msra.mxu0 %v114
    %139 = vmatprep.subr.bf16.mxu0 0
    %140 = vmatpush1.bf16.msra.mxu0 0
    %141 = vmatprep.subr.bf16.mxu0 0
    %142 = vmatpush1.bf16.msra.mxu0 0
    %143 = vmatprep.subr.bf16.mxu0 0
    %144 = vmatpush1.bf16.msra.mxu0 0
    %145 = vmatprep.subr.bf16.mxu0 0
    %146 = vmatpush1.bf16.msra.mxu0 0
    %147 = vmatprep.subr.bf16.mxu0 0
    %148 = vmatpush1.bf16.msra.mxu0 0
    %149 = vmatprep.subr.bf16.mxu0 0
    %150 = vmatpush1.bf16.msra.mxu0 0
    %151 = vmatprep.subr.bf16.mxu0 0
    %152 = vmatpush1.bf16.msra.mxu0 0
    %153 = vmatprep.subr.bf16.mxu0 0
    %154 = vmatpush1.bf16.msra.mxu0 0
    %155 = vmatprep.mubr.bf16.mxu0 0
    %156 = vmatmul.mubr.bf16.gmra.mrb[0].mxu0 %v73
    %v157 = vpop.f32.mrb[0].mxu0
    %v158 = vadd.f32 %v67, %v157
    %v159 = vpop.f32.mrb[0].mxu0
    %v160 = vpop.f32.mrb[0].mxu0
    %v161 = vadd.f32 %v67, %v160
    %v162 = vpop.f32.mrb[0].mxu0
    %163 = vdwg.mxu0
    %v164 = vmax.f32 %v158, 0.0
    %v165 = vmax.f32 %v161, 0.0
    %166 = vst [vmem:[#allocation7] sm:$0xff] %v164
    %167 = vst [vmem:[#allocation7 + $0x8] sm:$0xff] %v165
    // Predicated region
    $region22: #{tpu_custom_call.1} parent=1 // pred_check
      _
    $region23: #{tpu_custom_call.1} parent=1 // pred_check_branch
      %169 = sbr.rel (0) target = $region25
    $region24: #{tpu_custom_call.1} parent=1 // pred_region
      %s171 = ssub.s32 256, 256
      %172 = vsyncadd [#allocation4], %s171
      %s173 = sshll.u32 [#allocation7], 4
      %s174 = int_to_ptr.vmem [resolvable:$true] %s173
      %179 = dma.vmem_to_hbm [thread:$0]  %s174, 256, %s3, [#allocation4], 128, 128, 8
    $region25: #{tpu_custom_call.1} parent=1 // pred_fallthru
      _
    // Predicated region
    $region26: #{tpu_custom_call.1} parent=1 // pred_check
      _
    $region27: #{tpu_custom_call.1} parent=1 // pred_check_branch
      %181 = sbr.rel (0) target = $region29
    $region28: #{tpu_custom_call.1} parent=1 // pred_region
      %182 = dma.done [#allocation4], 256
    $region29: #{tpu_custom_call.1} parent=1 // pred_fallthru
      _
    %183 = vsyncpa [#allocation3], 1
    %184 = vsyncpa [#allocation6], 1
    %185 = vsyncpa [#allocation4], 1

</llo_original>
